<compile_context>
chip_gen: v7x
topology: tpu7x:2x2x1
jax: 0.10.0
libtpu: 0.0.40
codegen_flags: <defaults>
</compile_context>

<pallas_src>
import functools

import jax
import jax.numpy as jnp
from jax.experimental import pallas as pl
from jax.experimental.pallas import tpu as pltpu


def _round_up(x, m):
    return ((x + m - 1) // m) * m


def _vmem_limit_bytes(needed_bytes):
    """Generation-aware VMEM limit: ~85% of physical VMEM, >= needed."""
    cap = 64 << 20  # conservative fallback (v7x per-core VMEM)
    try:
        info = pltpu.get_tpu_info()
        cap = int(getattr(info, "vmem_capacity_bytes", cap) or cap)
    except Exception:
        pass
    cap = max(int(cap * 0.85), 16 << 20)   # leave Mosaic internal-scratch headroom
    return int(min(max(needed_bytes + (8 << 20), 32 << 20), cap))


# ----------------------------------------------------------------------------
# Kernels
# ----------------------------------------------------------------------------
def _trunk_kernel(batch_real, batch_norm, approx_swish, block_n, *refs):
    """Grid = (layer l, output-feature block n).

    refs (batch_norm=True):  x_hbm, w_trunk, bn(2,F), w_head, b_head, out,
                             h_scratch(2,Bp,Fp), dma_sem
    refs (batch_norm=False): x_hbm, w_trunk,          w_head, b_head, out,
                             h_scratch(2,Bp,Fp), dma_sem
    """
    if batch_norm:
        (x_hbm, w_ref, bn_ref, wh_ref, bh_ref, out_ref, h_scr, dma_sem) = refs
    else:
        (x_hbm, w_ref, wh_ref, bh_ref, out_ref, h_scr, dma_sem) = refs
        bn_ref = None

    eps = 1e-5
    l = pl.program_id(0)
    n = pl.program_id(1)
    n_layers = pl.num_programs(0)

    bp = h_scr.shape[1]
    tn = block_n
    need_mask = batch_norm and (bp != batch_real)

    # Step (0, 0): DMA the padded input from HBM straight into the layer-0 read
    # buffer (x is consumed exactly once; no resident double-buffered block).
    @pl.when(jnp.logical_and(l == 0, n == 0))
    def _():
        cp = pltpu.make_async_copy(x_hbm, h_scr.at[0], dma_sem)
        cp.start()
        cp.wait()

    col = pl.ds(pl.multiple_of(n * tn, 128), tn)

    def layer_step(h_in_ref, h_out_ref):
        w = w_ref[0]                                           # (Fp, TN)
        y = jnp.dot(h_in_ref[...].astype(w.dtype), w,
                    preferred_element_type=jnp.float32)        # (Bp, TN) f32

        if need_mask:
            row = jax.lax.broadcasted_iota(jnp.int32, (bp, 1), 0)
            row_mask = (row < batch_real).astype(jnp.float32)  # (Bp, 1)

        if batch_norm:
            inv_b = 1.0 / float(batch_real)                    # REAL batch size
            bn = bn_ref[0]                                     # (2, TN) f32
            gamma = bn[0:1, :]
            beta = bn[1:2, :]
            mean = jnp.sum(y, axis=0, keepdims=True) * inv_b
            c = y - mean                                       # two-pass variance
            c_stat = c * row_mask if need_mask else c
            var = jnp.sum(c_stat * c_stat, axis=0, keepdims=True) * inv_b
            y = c * (gamma * jax.lax.rsqrt(var + eps)) + beta

        # Swish: exp on the EUP; approximate reciprocal also on the EUP slot.
        if approx_swish:
            y = y * pl.reciprocal(1.0 + jnp.exp(-y), approx=True)
        else:
            y = y * jax.nn.sigmoid(y)

        if need_mask:
            # Keep padded batch rows exactly zero so the NEXT layer's BN sums
            # over the padded tile remain correct.
            y = y * row_mask

        h_out_ref[:, col] = y.astype(h_out_ref.dtype)

        # Fused [mu | logvar] head, streamed & accumulated during the last layer.
        @pl.when(l == n_layers - 1)
        def _():
            @pl.when(n == 0)
            def _():
                out_ref[...] = jnp.broadcast_to(bh_ref[...], out_ref.shape)
            wh = wh_ref[...]                                   # (TN, Hp)
            out_ref[...] = out_ref[...] + jnp.dot(
                y.astype(wh.dtype), wh, preferred_element_type=jnp.float32)

    # Ping-pong activation buffers: read slot (l % 2), write slot ((l+1) % 2).
    @pl.when(l % 2 == 0)
    def _():
        layer_step(h_scr.at[0], h_scr.at[1])

    @pl.when(l % 2 == 1)
    def _():
        layer_step(h_scr.at[1], h_scr.at[0])


def _head_only_kernel(x_ref, wh_ref, bh_ref, out_ref):
    """n_layers == 0: just the fused mu/logvar head on the raw input."""
    wh = wh_ref[...]
    out = jnp.dot(x_ref[...].astype(wh.dtype), wh,
                  preferred_element_type=jnp.float32) + bh_ref[...]
    out_ref[...] = out.astype(out_ref.dtype)


# ----------------------------------------------------------------------------
# Wrapper
# ----------------------------------------------------------------------------
def feature_encoder_forward(x, params, *, n_layers, batch_norm=True,
                            weight_dtype=jnp.float32, approx_swish=True,
                            block_n=None, deterministic=False):
    """x: (B, F) float32. Returns (mu, logvar) (or mu if deterministic)."""
    B, F = x.shape
    Z = params["w_mu"].shape[1]
    f32 = jnp.float32

    Bp = _round_up(max(B, 8), 8)             # sublane multiple
    Fp = _round_up(max(F, 128), 128)         # lane multiple
    Hp = _round_up(max(2 * Z, 128), 128)     # fused, lane-dense head width
    wdt = jnp.dtype(weight_dtype)
    wbytes = wdt.itemsize
    act_dtype = jnp.bfloat16 if wdt == jnp.dtype(jnp.bfloat16) else f32
    abytes = jnp.dtype(act_dtype).itemsize

    # Fused, padded head: columns [0:Z] = mu, [Z:2Z] = logvar, rest zero.
    w_head = (jnp.zeros((Fp, Hp), f32)
              .at[:F, :Z].set(params["w_mu"])
              .at[:F, Z:2 * Z].set(params["w_logvar"])
              .astype(weight_dtype))
    b_head = (jnp.zeros((1, Hp), f32)
              .at[:, :Z].set(params["b_mu"])
              .at[:, Z:2 * Z].set(params["b_logvar"]))

    if n_layers == 0:
        x_p = jnp.zeros((Bp, Fp), f32).at[:B, :F].set(x.astype(f32))
        vmem_needed = (2 * Bp * Fp * 4 + 2 * Fp * Hp * wbytes
                       + 2 * Hp * 4 + 2 * Bp * Hp * 4)
        out = pl.pallas_call(
            _head_only_kernel,
            out_shape=jax.ShapeDtypeStruct((Bp, Hp), f32),
            in_specs=[
                pl.BlockSpec((Bp, Fp), lambda: (0, 0)),
                pl.BlockSpec((Fp, Hp), lambda: (0, 0)),
                pl.BlockSpec((1, Hp), lambda: (0, 0)),
            ],
            out_specs=pl.BlockSpec((Bp, Hp), lambda: (0, 0)),
            compiler_params=pltpu.CompilerParams(
                vmem_limit_bytes=_vmem_limit_bytes(vmem_needed)),
        )(x_p, w_head, b_head)
    else:
        L = n_layers
        if block_n is None:
            for cand in (1024, 512, 256, 128):
                if Fp % cand == 0:
                    block_n = cand
                    break
        assert Fp % block_n == 0 and block_n % 128 == 0
        nb = Fp // block_n
        last = L - 1

        # Padded input in the activation dtype (DMA'd into scratch in-kernel).
        x_p = jnp.zeros((Bp, Fp), act_dtype).at[:B, :F].set(x.astype(act_dtype))
        w_trunk = (jnp.zeros((L, Fp, Fp), f32)
                   .at[:, :F, :F].set(params["w_trunk"][:L])
                   .astype(weight_dtype))

        in_specs = [
            pl.BlockSpec(memory_space=pl.ANY),                        # x (HBM)
            pl.BlockSpec((1, Fp, block_n), lambda l, n: (l, 0, n)),   # W column blk
        ]
        args = [x_p, w_trunk]
        if batch_norm:
            bn = (jnp.zeros((L, 2, Fp), f32)
                  .at[:, 0, :F].set(params["bn_gamma"][:L])
                  .at[:, 1, :F].set(params["bn_beta"][:L]))
            in_specs.append(pl.BlockSpec((1, 2, block_n), lambda l, n: (l, 0, n)))
            args.append(bn)
        # Head weight: constant block 0 during the trunk, streamed row blocks
        # only during the last layer (overlaps head DMA with last-layer compute).
        in_specs += [
            pl.BlockSpec((block_n, Hp),
                         lambda l, n: (jnp.where(l == last, n, 0), 0)),
            pl.BlockSpec((1, Hp), lambda l, n: (0, 0)),
        ]
        args += [w_head, b_head]

        vmem_needed = (
            2 * Bp * Fp * abytes                 # ping-pong activation scratch
            + 2 * Fp * block_n * wbytes          # double-buffered trunk W block
            + 2 * block_n * Hp * wbytes          # double-buffered head W block
            + (2 * 2 * block_n * 4 if batch_norm else 0)
            + 2 * Hp * 4                         # head bias
            + 2 * Bp * Hp * 4                    # output block
            + 2 * Bp * block_n * 4               # f32 compute tile headroom
        )

        cost = pl.CostEstimate(
            flops=2 * Bp * Fp * Fp * L + 2 * Bp * Fp * Hp + 12 * Bp * Fp * L,
            transcendentals=Bp * Fp * L * (2 if approx_swish else 1),
            bytes_accessed=(L * Fp * Fp * wbytes + Bp * Fp * abytes
                            + Fp * Hp * wbytes + Bp * Hp * 4
                            + (L * 2 * Fp * 4 if batch_norm else 0)),
        )

        kernel = functools.partial(_trunk_kernel, B, batch_norm, approx_swish,
                                   block_n)
        out = pl.pallas_call(
            kernel,
            out_shape=jax.ShapeDtypeStruct((Bp, Hp), f32),
            grid_spec=pltpu.PrefetchScalarGridSpec(
                num_scalar_prefetch=0,
                grid=(L, nb),
                in_specs=in_specs,
                out_specs=pl.BlockSpec((Bp, Hp), lambda l, n: (0, 0)),
                scratch_shapes=[
                    pltpu.VMEM((2, Bp, Fp), act_dtype),
                    pltpu.SemaphoreType.DMA(()),
                ],
            ),
            compiler_params=pltpu.CompilerParams(
                # layer axis and BN-coupled feature axis are both sequential
                dimension_semantics=("arbitrary", "arbitrary"),
                vmem_limit_bytes=_vmem_limit_bytes(vmem_needed),
            ),
            cost_estimate=cost,
        )(*args)

    mu = out[:B, :Z]
    logvar = out[:B, Z:2 * Z]
    if deterministic:
        return mu
    return mu, logvar


# ----------------------------------------------------------------------------
# Params / reference
# ----------------------------------------------------------------------------
def init_params(key, *, n_layers, in_features, latent_space_size,
                mu_weight_std=0.001, mu_bias=0.0,
                logvar_weight_std=0.01, logvar_bias=0.0):
    """Synthetic init matching the module's parameter shapes.

    Trunk Linear weights stored as (in, out) = transpose of PyTorch's (out, in).
    BatchNorm gamma=1, beta=0 (PyTorch default).
    """
    F, Z = in_features, latent_space_size
    L = max(n_layers, 1)
    k1, k2, k3 = jax.random.split(key, 3)

    w_trunk = 0.05 * jax.random.normal(k1, (L, F, F), dtype=jnp.float32)
    if n_layers == 0:
        w_trunk = jnp.zeros((L, F, F), jnp.float32)  # unused placeholder

    return dict(
        w_trunk=w_trunk,
        bn_gamma=jnp.ones((L, F), jnp.float32),
        bn_beta=jnp.zeros((L, F), jnp.float32),
        w_mu=(mu_weight_std * jax.random.normal(k2, (F, Z), dtype=jnp.float32)),
        b_mu=jnp.full((1, Z), mu_bias, jnp.float32),
        w_logvar=(logvar_weight_std
                  * jax.random.normal(k3, (F, Z), dtype=jnp.float32)),
        b_logvar=jnp.full((1, Z), logvar_bias, jnp.float32),
    )


def reference_forward(x, params, *, n_layers, batch_norm=True):
    """Pure-JAX reference of the PyTorch forward (training-mode BatchNorm)."""
    eps = 1e-5
    hi = jax.lax.Precision.HIGHEST
    h = x
    for i in range(n_layers):
        h = jnp.dot(h, params["w_trunk"][i], precision=hi)
        if batch_norm:
            mean = jnp.mean(h, axis=0, keepdims=True)
            var = jnp.mean((h - mean) ** 2, axis=0, keepdims=True)
            h = (h - mean) / jnp.sqrt(var + eps)
            h = h * params["bn_gamma"][i][None, :] + params["bn_beta"][i][None, :]
        h = h * jax.nn.sigmoid(h)
    mu = jnp.dot(h, params["w_mu"], precision=hi) + params["b_mu"]
    logvar = jnp.dot(h, params["w_logvar"], precision=hi) + params["b_logvar"]
    return mu, logvar


# ----------------------------------------------------------------------------
# Self-test
# ----------------------------------------------------------------------------
if __name__ == "__main__":
    key = jax.random.PRNGKey(0)
    kx, kp, kx2, kp2 = jax.random.split(key, 4)

    # Config 1: F=32 (Fp=128, single N block), B=8, L=2, BN on.
    B, F, Z, L = 8, 32, 16, 2
    x = jax.random.normal(kx, (B, F), dtype=jnp.float32)
    params = init_params(kp, n_layers=L, in_features=F, latent_space_size=Z)
    mu_ref, lv_ref = reference_forward(x, params, n_layers=L, batch_norm=True)

    # (a) f32 weights, exact swish
    mu, lv = feature_encoder_forward(x, params, n_layers=L, batch_norm=True,
                                     approx_swish=False)
    jax.block_until_ready((mu, lv))
    assert mu.shape == (B, Z) and lv.shape == (B, Z)
    assert jnp.allclose(mu, mu_ref, atol=1e-3, rtol=1e-2)
    assert jnp.allclose(lv, lv_ref, atol=1e-3, rtol=1e-2)

    # (b) default performance path (approx-reciprocal swish on the EUP)
    mu_a, lv_a = feature_encoder_forward(x, params, n_layers=L, batch_norm=True)
    jax.block_until_ready((mu_a, lv_a))
    assert jnp.allclose(mu_a, mu_ref, atol=1e-2, rtol=5e-2)
    assert jnp.allclose(lv_a, lv_ref, atol=1e-2, rtol=5e-2)

    # (c) ragged batch (padded rows must not pollute BN stats)
    x6 = x[:6]
    mu6, lv6 = feature_encoder_forward(x6, params, n_layers=L, batch_norm=True,
                                       approx_swish=False)
    jax.block_until_ready((mu6, lv6))
    mu6_ref, lv6_ref = reference_forward(x6, params, n_layers=L, batch_norm=True)
    assert jnp.allclose(mu6, mu6_ref, atol=1e-3, rtol=1e-2)
    assert jnp.allclose(lv6, lv6_ref, atol=1e-3, rtol=1e-2)

    # (d) bf16 weights + bf16 activation storage (MXU-native path)
    mu_bf, lv_bf = feature_encoder_forward(x, params, n_layers=L,
                                           batch_norm=True,
                                           weight_dtype=jnp.bfloat16,
                                           approx_swish=False)
    jax.block_until_ready((mu_bf, lv_bf))
    assert jnp.allclose(mu_bf, mu_ref, atol=2e-2, rtol=1e-1)
    assert jnp.allclose(lv_bf, lv_ref, atol=2e-2, rtol=1e-1)

    # (e) N-tiled trunk (Fp=256, block_n=128 -> 2 column blocks), 3 layers
    B2, F2, Z2, L2 = 8, 200, 16, 3
    x2 = jax.random.normal(kx2, (B2, F2), dtype=jnp.float32)
    params2 = init_params(kp2, n_layers=L2, in_features=F2,
                          latent_space_size=Z2)
    mu2, lv2 = feature_encoder_forward(x2, params2, n_layers=L2,
                                       batch_norm=True, approx_swish=False,
                                       block_n=128)
    jax.block_until_ready((mu2, lv2))
    mu2_ref, lv2_ref = reference_forward(x2, params2, n_layers=L2,
                                         batch_norm=True)
    assert jnp.allclose(mu2, mu2_ref, atol=1e-3, rtol=1e-2)
    assert jnp.allclose(lv2, lv2_ref, atol=1e-3, rtol=1e-2)

    # (f) batch_norm=False (no masking / BN DMA at all)
    mu_nb, lv_nb = feature_encoder_forward(x, params, n_layers=L,
                                           batch_norm=False, approx_swish=False)
    jax.block_until_ready((mu_nb, lv_nb))
    mu_nb_ref, lv_nb_ref = reference_forward(x, params, n_layers=L,
                                             batch_norm=False)
    assert jnp.allclose(mu_nb, mu_nb_ref, atol=1e-3, rtol=1e-2)
    assert jnp.allclose(lv_nb, lv_nb_ref, atol=1e-3, rtol=1e-2)

    # (g) degenerate n_layers == 0 (head-only kernel)
    mu0, lv0 = feature_encoder_forward(x, params, n_layers=0, batch_norm=True)
    jax.block_until_ready((mu0, lv0))
    mu0_ref, lv0_ref = reference_forward(x, params, n_layers=0, batch_norm=True)
    assert jnp.allclose(mu0, mu0_ref, atol=1e-3, rtol=1e-2)
    assert jnp.allclose(lv0, lv0_ref, atol=1e-3, rtol=1e-2)

    # TODO(synk): BatchNorm running-stat updates / eval-mode normalization are
    # not modeled (train-mode batch statistics only, matching module training).
    print("KERNEL_OK")
</pallas_src>

<mosaic_0001>
module attributes {stable_mosaic.version = 11 : i64} {
  func.func @_trunk_kernel(%arg0: i32, %arg1: i32, %arg2: memref<8x128xf32, #tpu.memory_space<any>>, %arg3: memref<1x128x128xf32, #tpu.memory_space<vmem>>, %arg4: memref<1x2x128xf32, #tpu.memory_space<vmem>>, %arg5: memref<128x128xf32, #tpu.memory_space<vmem>>, %arg6: memref<1x128xf32, #tpu.memory_space<vmem>>, %arg7: memref<8x128xf32, #tpu.memory_space<vmem>>, %arg8: memref<2x8x128xf32, #tpu.memory_space<vmem>>, %arg9: memref<!tpu.dma_semaphore, #tpu.memory_space<semaphore_mem>>) attributes {dimension_semantics = [#tpu.dimension_semantics<arbitrary>, #tpu.dimension_semantics<arbitrary>], iteration_bounds = array<i64: 2, 1>, scalar_prefetch = 0 : i64, scratch_operands = 2 : i64, tpu.core_type = #tpu.core_type<tc>, window_params = [{}, {transform_indices = @transform_1, window_bounds = array<i64: 1, 128, 128>}, {transform_indices = @transform_2, window_bounds = array<i64: 1, 2, 128>}, {transform_indices = @transform_3, window_bounds = array<i64: 128, 128>}, {pipeline_mode = #tpu.pipeline_mode<synchronous>, transform_indices = @transform_4, window_bounds = array<i64: 1, 128>}, {pipeline_mode = #tpu.pipeline_mode<synchronous>, transform_indices = @transform_5, window_bounds = array<i64: 8, 128>}]} {
    %c0_i32 = arith.constant 0 : i32
    %0 = arith.cmpi eq, %arg0, %c0_i32 : i32
    %c0_i32_0 = arith.constant 0 : i32
    %1 = arith.cmpi eq, %arg1, %c0_i32_0 : i32
    %2 = arith.andi %0, %1 : i1
    %3 = arith.extui %2 : i1 to i32
    %c0_i32_1 = arith.constant 0 : i32
    %4 = arith.cmpi ne, %3, %c0_i32_1 : i32
    scf.if %4 {
      %c0_i32_16 = arith.constant 0 : i32
      %c0_i32_17 = arith.constant 0 : i32
      %c0_i32_18 = arith.constant 0 : i32
      %33 = tpu.memref_slice %arg8[%c0_i32_16, %c0_i32_17, %c0_i32_18] : memref<2x8x128xf32, #tpu.memory_space<vmem>> -> memref<1x8x128xf32, #tpu.memory_space<vmem>>
      %34 = tpu.memref_squeeze %33 : memref<1x8x128xf32, #tpu.memory_space<vmem>> -> memref<8x128xf32, #tpu.memory_space<vmem>>
      tpu.enqueue_dma source(%arg2 : memref<8x128xf32, #tpu.memory_space<any>>) target(%34 : memref<8x128xf32, #tpu.memory_space<vmem>>) target_semaphore(%arg9 : memref<!tpu.dma_semaphore, #tpu.memory_space<semaphore_mem>>)
      %c0_i32_19 = arith.constant 0 : i32
      %c0_i32_20 = arith.constant 0 : i32
      %c0_i32_21 = arith.constant 0 : i32
      %35 = tpu.memref_slice %arg8[%c0_i32_19, %c0_i32_20, %c0_i32_21] : memref<2x8x128xf32, #tpu.memory_space<vmem>> -> memref<1x8x128xf32, #tpu.memory_space<vmem>>
      %36 = tpu.memref_squeeze %35 : memref<1x8x128xf32, #tpu.memory_space<vmem>> -> memref<8x128xf32, #tpu.memory_space<vmem>>
      tpu.wait_dma2 semaphore(%arg9 : memref<!tpu.dma_semaphore, #tpu.memory_space<semaphore_mem>>) src(%arg2 : memref<8x128xf32, #tpu.memory_space<any>>) dst(%36 : memref<8x128xf32, #tpu.memory_space<vmem>>)
    } else {
    }
    %c128_i32 = arith.constant 128 : i32
    %5 = arith.muli %arg1, %c128_i32 : i32
    %6 = tpu.assume_multiple %5, 128 : i32
    %c2_i32 = arith.constant 2 : i32
    %c0_i32_2 = arith.constant 0 : i32
    %7 = arith.cmpi eq, %c2_i32, %c0_i32_2 : i32
    %c1_i32 = arith.constant 1 : i32
    %8 = arith.select %7, %c1_i32, %c2_i32 : i32
    %9 = arith.remsi %arg0, %8 : i32
    %c0_i32_3 = arith.constant 0 : i32
    %10 = arith.cmpi ne, %9, %c0_i32_3 : i32
    %c0_i32_4 = arith.constant 0 : i32
    %11 = arith.cmpi slt, %9, %c0_i32_4 : i32
    %c0_i32_5 = arith.constant 0 : i32
    %12 = arith.cmpi slt, %8, %c0_i32_5 : i32
    %13 = arith.xori %11, %12 : i1
    %14 = arith.andi %13, %10 : i1
    %15 = arith.addi %9, %8 : i32
    %16 = arith.select %14, %15, %9 : i32
    %c0_i32_6 = arith.constant 0 : i32
    %17 = arith.cmpi eq, %16, %c0_i32_6 : i32
    %18 = arith.extui %17 : i1 to i32
    %c0_i32_7 = arith.constant 0 : i32
    %19 = arith.cmpi ne, %18, %c0_i32_7 : i32
    scf.if %19 {
      %c0 = arith.constant 0 : index
      %c0_16 = arith.constant 0 : index
      %c0_17 = arith.constant 0 : index
      %33 = vector.load %arg3[%c0, %c0_16, %c0_17] : memref<1x128x128xf32, #tpu.memory_space<vmem>>, vector<1x128x128xf32>
      %34 = vector.shape_cast %33 : vector<1x128x128xf32> to vector<128x128xf32>
      %c0_18 = arith.constant 0 : index
      %c0_19 = arith.constant 0 : index
      %c0_20 = arith.constant 0 : index
      %35 = vector.load %arg8[%c0_18, %c0_19, %c0_20] : memref<2x8x128xf32, #tpu.memory_space<vmem>>, vector<1x8x128xf32>
      %36 = vector.shape_cast %35 : vector<1x8x128xf32> to vector<8x128xf32>
      %cst = arith.constant dense<0.000000e+00> : vector<8x128xf32>
      %37 = tpu.matmul %36, %34, %cst {dimension_numbers = #tpu.dot_dimension_numbers<[1], [0], [0], [1], [0, 0, 1, 1], [], []>} : vector<8x128xf32>, vector<128x128xf32>, vector<8x128xf32> -> vector<8x128xf32>
      %c0_21 = arith.constant 0 : index
      %c0_22 = arith.constant 0 : index
      %c0_23 = arith.constant 0 : index
      %38 = vector.load %arg4[%c0_21, %c0_22, %c0_23] : memref<1x2x128xf32, #tpu.memory_space<vmem>>, vector<1x2x128xf32>
      %39 = vector.shape_cast %38 : vector<1x2x128xf32> to vector<2x128xf32>
      %40 = vector.extract_strided_slice %39 {offsets = [0, 0], sizes = [1, 128], strides = [1, 1]} : vector<2x128xf32> to vector<1x128xf32>
      %41 = vector.extract_strided_slice %39 {offsets = [1, 0], sizes = [1, 128], strides = [1, 1]} : vector<2x128xf32> to vector<1x128xf32>
      %cst_24 = arith.constant dense<0.000000e+00> : vector<128xf32>
      %42 = vector.multi_reduction <add>, %37, %cst_24 [0] : vector<8x128xf32> to vector<128xf32>
      %43 = vector.shape_cast %42 : vector<128xf32> to vector<1x128xf32>
      %cst_25 = arith.constant 1.250000e-01 : f32
      %44 = vector.broadcast %cst_25 : f32 to vector<1x128xf32>
      %45 = arith.mulf %43, %44 : vector<1x128xf32>
      %46 = vector.broadcast %45 : vector<1x128xf32> to vector<8x128xf32>
      %47 = arith.subf %37, %46 : vector<8x128xf32>
      %48 = arith.mulf %47, %47 : vector<8x128xf32>
      %cst_26 = arith.constant dense<0.000000e+00> : vector<128xf32>
      %49 = vector.multi_reduction <add>, %48, %cst_26 [0] : vector<8x128xf32> to vector<128xf32>
      %50 = vector.shape_cast %49 : vector<128xf32> to vector<1x128xf32>
      %cst_27 = arith.constant 1.250000e-01 : f32
      %51 = vector.broadcast %cst_27 : f32 to vector<1x128xf32>
      %52 = arith.mulf %50, %51 : vector<1x128xf32>
      %cst_28 = arith.constant 9.99999974E-6 : f32
      %53 = vector.broadcast %cst_28 : f32 to vector<1x128xf32>
      %54 = arith.addf %52, %53 : vector<1x128xf32>
      %55 = math.rsqrt %54 : vector<1x128xf32>
      %56 = arith.mulf %40, %55 : vector<1x128xf32>
      %57 = vector.broadcast %56 : vector<1x128xf32> to vector<8x128xf32>
      %58 = arith.mulf %47, %57 : vector<8x128xf32>
      %59 = vector.broadcast %41 : vector<1x128xf32> to vector<8x128xf32>
      %60 = arith.addf %58, %59 : vector<8x128xf32>
      %61 = arith.negf %60 : vector<8x128xf32>
      %62 = math.exp %61 : vector<8x128xf32>
      %cst_29 = arith.constant 1.000000e+00 : f32
      %63 = vector.broadcast %cst_29 : f32 to vector<8x128xf32>
      %64 = arith.addf %63, %62 : vector<8x128xf32>
      %65 = arith.divf %63, %64 : vector<8x128xf32>
      %66 = arith.mulf %60, %65 : vector<8x128xf32>
      %c1_i32_30 = arith.constant 1 : i32
      %c0_i32_31 = arith.constant 0 : i32
      %c0_i32_32 = arith.constant 0 : i32
      %67 = tpu.memref_slice %arg8[%c1_i32_30, %c0_i32_31, %c0_i32_32] : memref<2x8x128xf32, #tpu.memory_space<vmem>> -> memref<1x8x128xf32, #tpu.memory_space<vmem>>
      %68 = tpu.memref_squeeze %67 : memref<1x8x128xf32, #tpu.memory_space<vmem>> -> memref<8x128xf32, #tpu.memory_space<vmem>>
      %c0_33 = arith.constant 0 : index
      %69 = arith.index_cast %6 : i32 to index
      %70 = vector.load %68[%c0_33, %69] : memref<8x128xf32, #tpu.memory_space<vmem>>, vector<8x128xf32>
      tpu.vector_store %68[%c0_33, %69], %66 {strides = array<i32>} : memref<8x128xf32, #tpu.memory_space<vmem>>, vector<8x128xf32>,
      %c1_i32_34 = arith.constant 1 : i32
      %71 = arith.cmpi eq, %arg0, %c1_i32_34 : i32
      %72 = arith.extui %71 : i1 to i32
      %c0_i32_35 = arith.constant 0 : i32
      %73 = arith.cmpi ne, %72, %c0_i32_35 : i32
      scf.if %73 {
        %c0_i32_36 = arith.constant 0 : i32
        %74 = arith.cmpi eq, %arg1, %c0_i32_36 : i32
        %75 = arith.extui %74 : i1 to i32
        %c0_i32_37 = arith.constant 0 : i32
        %76 = arith.cmpi ne, %75, %c0_i32_37 : i32
        scf.if %76 {
          %c0_45 = arith.constant 0 : index
          %c0_46 = arith.constant 0 : index
          %82 = vector.load %arg6[%c0_45, %c0_46] : memref<1x128xf32, #tpu.memory_space<vmem>>, vector<1x128xf32>
          %83 = vector.shape_cast %82 : vector<1x128xf32> to vector<1x128xf32>
          %84 = vector.broadcast %83 : vector<1x128xf32> to vector<8x128xf32>
          %c0_47 = arith.constant 0 : index
          %c0_48 = arith.constant 0 : index
          %85 = vector.load %arg7[%c0_47, %c0_48] : memref<8x128xf32, #tpu.memory_space<vmem>>, vector<8x128xf32>
          tpu.vector_store %arg7[%c0_47, %c0_48], %84 {strides = array<i32>} : memref<8x128xf32, #tpu.memory_space<vmem>>, vector<8x128xf32>,
        } else {
        }
        %c0_38 = arith.constant 0 : index
        %c0_39 = arith.constant 0 : index
        %77 = vector.load %arg5[%c0_38, %c0_39] : memref<128x128xf32, #tpu.memory_space<vmem>>, vector<128x128xf32>
        %c0_40 = arith.constant 0 : index
        %c0_41 = arith.constant 0 : index
        %78 = vector.load %arg7[%c0_40, %c0_41] : memref<8x128xf32, #tpu.memory_space<vmem>>, vector<8x128xf32>
        %cst_42 = arith.constant dense<0.000000e+00> : vector<8x128xf32>
        %79 = tpu.matmul %66, %77, %cst_42 {dimension_numbers = #tpu.dot_dimension_numbers<[1], [0], [0], [1], [0, 0, 1, 1], [], []>} : vector<8x128xf32>, vector<128x128xf32>, vector<8x128xf32> -> vector<8x128xf32>
        %80 = arith.addf %78, %79 : vector<8x128xf32>
        %c0_43 = arith.constant 0 : index
        %c0_44 = arith.constant 0 : index
        %81 = vector.load %arg7[%c0_43, %c0_44] : memref<8x128xf32, #tpu.memory_space<vmem>>, vector<8x128xf32>
        tpu.vector_store %arg7[%c0_43, %c0_44], %80 {strides = array<i32>} : memref<8x128xf32, #tpu.memory_space<vmem>>, vector<8x128xf32>,
      } else {
      }
    } else {
    }
    %c2_i32_8 = arith.constant 2 : i32
    %c0_i32_9 = arith.constant 0 : i32
    %20 = arith.cmpi eq, %c2_i32_8, %c0_i32_9 : i32
    %c1_i32_10 = arith.constant 1 : i32
    %21 = arith.select %20, %c1_i32_10, %c2_i32_8 : i32
    %22 = arith.remsi %arg0, %21 : i32
    %c0_i32_11 = arith.constant 0 : i32
    %23 = arith.cmpi ne, %22, %c0_i32_11 : i32
    %c0_i32_12 = arith.constant 0 : i32
    %24 = arith.cmpi slt, %22, %c0_i32_12 : i32
    %c0_i32_13 = arith.constant 0 : i32
    %25 = arith.cmpi slt, %21, %c0_i32_13 : i32
    %26 = arith.xori %24, %25 : i1
    %27 = arith.andi %26, %23 : i1
    %28 = arith.addi %22, %21 : i32
    %29 = arith.select %27, %28, %22 : i32
    %c1_i32_14 = arith.constant 1 : i32
    %30 = arith.cmpi eq, %29, %c1_i32_14 : i32
    %31 = arith.extui %30 : i1 to i32
    %c0_i32_15 = arith.constant 0 : i32
    %32 = arith.cmpi ne, %31, %c0_i32_15 : i32
    scf.if %32 {
      %c0 = arith.constant 0 : index
      %c0_16 = arith.constant 0 : index
      %c0_17 = arith.constant 0 : index
      %33 = vector.load %arg3[%c0, %c0_16, %c0_17] : memref<1x128x128xf32, #tpu.memory_space<vmem>>, vector<1x128x128xf32>
      %34 = vector.shape_cast %33 : vector<1x128x128xf32> to vector<128x128xf32>
      %c1 = arith.constant 1 : index
      %c0_18 = arith.constant 0 : index
      %c0_19 = arith.constant 0 : index
      %35 = vector.load %arg8[%c1, %c0_18, %c0_19] : memref<2x8x128xf32, #tpu.memory_space<vmem>>, vector<1x8x128xf32>
      %36 = vector.shape_cast %35 : vector<1x8x128xf32> to vector<8x128xf32>
      %cst = arith.constant dense<0.000000e+00> : vector<8x128xf32>
      %37 = tpu.matmul %36, %34, %cst {dimension_numbers = #tpu.dot_dimension_numbers<[1], [0], [0], [1], [0, 0, 1, 1], [], []>} : vector<8x128xf32>, vector<128x128xf32>, vector<8x128xf32> -> vector<8x128xf32>
      %c0_20 = arith.constant 0 : index
      %c0_21 = arith.constant 0 : index
      %c0_22 = arith.constant 0 : index
      %38 = vector.load %arg4[%c0_20, %c0_21, %c0_22] : memref<1x2x128xf32, #tpu.memory_space<vmem>>, vector<1x2x128xf32>
      %39 = vector.shape_cast %38 : vector<1x2x128xf32> to vector<2x128xf32>
      %40 = vector.extract_strided_slice %39 {offsets = [0, 0], sizes = [1, 128], strides = [1, 1]} : vector<2x128xf32> to vector<1x128xf32>
      %41 = vector.extract_strided_slice %39 {offsets = [1, 0], sizes = [1, 128], strides = [1, 1]} : vector<2x128xf32> to vector<1x128xf32>
      %cst_23 = arith.constant dense<0.000000e+00> : vector<128xf32>
      %42 = vector.multi_reduction <add>, %37, %cst_23 [0] : vector<8x128xf32> to vector<128xf32>
      %43 = vector.shape_cast %42 : vector<128xf32> to vector<1x128xf32>
      %cst_24 = arith.constant 1.250000e-01 : f32
      %44 = vector.broadcast %cst_24 : f32 to vector<1x128xf32>
      %45 = arith.mulf %43, %44 : vector<1x128xf32>
      %46 = vector.broadcast %45 : vector<1x128xf32> to vector<8x128xf32>
      %47 = arith.subf %37, %46 : vector<8x128xf32>
      %48 = arith.mulf %47, %47 : vector<8x128xf32>
      %cst_25 = arith.constant dense<0.000000e+00> : vector<128xf32>
      %49 = vector.multi_reduction <add>, %48, %cst_25 [0] : vector<8x128xf32> to vector<128xf32>
      %50 = vector.shape_cast %49 : vector<128xf32> to vector<1x128xf32>
      %cst_26 = arith.constant 1.250000e-01 : f32
      %51 = vector.broadcast %cst_26 : f32 to vector<1x128xf32>
      %52 = arith.mulf %50, %51 : vector<1x128xf32>
      %cst_27 = arith.constant 9.99999974E-6 : f32
      %53 = vector.broadcast %cst_27 : f32 to vector<1x128xf32>
      %54 = arith.addf %52, %53 : vector<1x128xf32>
      %55 = math.rsqrt %54 : vector<1x128xf32>
      %56 = arith.mulf %40, %55 : vector<1x128xf32>
      %57 = vector.broadcast %56 : vector<1x128xf32> to vector<8x128xf32>
      %58 = arith.mulf %47, %57 : vector<8x128xf32>
      %59 = vector.broadcast %41 : vector<1x128xf32> to vector<8x128xf32>
      %60 = arith.addf %58, %59 : vector<8x128xf32>
      %61 = arith.negf %60 : vector<8x128xf32>
      %62 = math.exp %61 : vector<8x128xf32>
      %cst_28 = arith.constant 1.000000e+00 : f32
      %63 = vector.broadcast %cst_28 : f32 to vector<8x128xf32>
      %64 = arith.addf %63, %62 : vector<8x128xf32>
      %65 = arith.divf %63, %64 : vector<8x128xf32>
      %66 = arith.mulf %60, %65 : vector<8x128xf32>
      %c0_i32_29 = arith.constant 0 : i32
      %c0_i32_30 = arith.constant 0 : i32
      %c0_i32_31 = arith.constant 0 : i32
      %67 = tpu.memref_slice %arg8[%c0_i32_29, %c0_i32_30, %c0_i32_31] : memref<2x8x128xf32, #tpu.memory_space<vmem>> -> memref<1x8x128xf32, #tpu.memory_space<vmem>>
      %68 = tpu.memref_squeeze %67 : memref<1x8x128xf32, #tpu.memory_space<vmem>> -> memref<8x128xf32, #tpu.memory_space<vmem>>
      %c0_32 = arith.constant 0 : index
      %69 = arith.index_cast %6 : i32 to index
      %70 = vector.load %68[%c0_32, %69] : memref<8x128xf32, #tpu.memory_space<vmem>>, vector<8x128xf32>
      tpu.vector_store %68[%c0_32, %69], %66 {strides = array<i32>} : memref<8x128xf32, #tpu.memory_space<vmem>>, vector<8x128xf32>,
      %c1_i32_33 = arith.constant 1 : i32
      %71 = arith.cmpi eq, %arg0, %c1_i32_33 : i32
      %72 = arith.extui %71 : i1 to i32
      %c0_i32_34 = arith.constant 0 : i32
      %73 = arith.cmpi ne, %72, %c0_i32_34 : i32
      scf.if %73 {
        %c0_i32_35 = arith.constant 0 : i32
        %74 = arith.cmpi eq, %arg1, %c0_i32_35 : i32
        %75 = arith.extui %74 : i1 to i32
        %c0_i32_36 = arith.constant 0 : i32
        %76 = arith.cmpi ne, %75, %c0_i32_36 : i32
        scf.if %76 {
          %c0_44 = arith.constant 0 : index
          %c0_45 = arith.constant 0 : index
          %82 = vector.load %arg6[%c0_44, %c0_45] : memref<1x128xf32, #tpu.memory_space<vmem>>, vector<1x128xf32>
          %83 = vector.shape_cast %82 : vector<1x128xf32> to vector<1x128xf32>
          %84 = vector.broadcast %83 : vector<1x128xf32> to vector<8x128xf32>
          %c0_46 = arith.constant 0 : index
          %c0_47 = arith.constant 0 : index
          %85 = vector.load %arg7[%c0_46, %c0_47] : memref<8x128xf32, #tpu.memory_space<vmem>>, vector<8x128xf32>
          tpu.vector_store %arg7[%c0_46, %c0_47], %84 {strides = array<i32>} : memref<8x128xf32, #tpu.memory_space<vmem>>, vector<8x128xf32>,
        } else {
        }
        %c0_37 = arith.constant 0 : index
        %c0_38 = arith.constant 0 : index
        %77 = vector.load %arg5[%c0_37, %c0_38] : memref<128x128xf32, #tpu.memory_space<vmem>>, vector<128x128xf32>
        %c0_39 = arith.constant 0 : index
        %c0_40 = arith.constant 0 : index
        %78 = vector.load %arg7[%c0_39, %c0_40] : memref<8x128xf32, #tpu.memory_space<vmem>>, vector<8x128xf32>
        %cst_41 = arith.constant dense<0.000000e+00> : vector<8x128xf32>
        %79 = tpu.matmul %66, %77, %cst_41 {dimension_numbers = #tpu.dot_dimension_numbers<[1], [0], [0], [1], [0, 0, 1, 1], [], []>} : vector<8x128xf32>, vector<128x128xf32>, vector<8x128xf32> -> vector<8x128xf32>
        %80 = arith.addf %78, %79 : vector<8x128xf32>
        %c0_42 = arith.constant 0 : index
        %c0_43 = arith.constant 0 : index
        %81 = vector.load %arg7[%c0_42, %c0_43] : memref<8x128xf32, #tpu.memory_space<vmem>>, vector<8x128xf32>
        tpu.vector_store %arg7[%c0_42, %c0_43], %80 {strides = array<i32>} : memref<8x128xf32, #tpu.memory_space<vmem>>, vector<8x128xf32>,
      } else {
      }
    } else {
    }
    return
  }
  func.func @transform_1(%arg0: i32, %arg1: i32) -> (i32, i32, i32) {
    %c0_i32 = arith.constant 0 : i32
    %c0_i32_0 = arith.constant 0 : i32
    return %arg0, %c0_i32, %arg1 : i32, i32, i32
  }
  func.func @transform_2(%arg0: i32, %arg1: i32) -> (i32, i32, i32) {
    %c0_i32 = arith.constant 0 : i32
    %c0_i32_0 = arith.constant 0 : i32
    return %arg0, %c0_i32, %arg1 : i32, i32, i32
  }
  func.func @transform_3(%arg0: i32, %arg1: i32) -> (i32, i32) {
    %c1_i32 = arith.constant 1 : i32
    %0 = arith.cmpi eq, %arg0, %c1_i32 : i32
    %c0_i32 = arith.constant 0 : i32
    %1 = arith.select %0, %arg1, %c0_i32 : i32
    %c0_i32_0 = arith.constant 0 : i32
    %c0_i32_1 = arith.constant 0 : i32
    return %1, %c0_i32_0 : i32, i32
  }
  func.func @transform_4(%arg0: i32, %arg1: i32) -> (i32, i32) {
    %c0_i32 = arith.constant 0 : i32
    %c0_i32_0 = arith.constant 0 : i32
    %c0_i32_1 = arith.constant 0 : i32
    return %c0_i32, %c0_i32_0 : i32, i32
  }
  func.func @transform_5(%arg0: i32, %arg1: i32) -> (i32, i32) {
    %c0_i32 = arith.constant 0 : i32
    %c0_i32_0 = arith.constant 0 : i32
    %c0_i32_1 = arith.constant 0 : i32
    return %c0_i32, %c0_i32_0 : i32, i32
  }
}

</mosaic_0001>

<llo_original>
// kernel: tpu_custom_call.1
$region0: #{tpu_custom_call.1}
  #allocation0 [shape = 'u32[]', space=smem, size = 0x4, offset = 0x4, fixed_abs, tag = 'smem constant byte address 0x4 - core index']
  #allocation1 [shape = 'u32[144,128]{1,0:T(1,128)}', space=vmem, size = 0x12000, scoped, tag = 'internal scratch']
  #allocation2 [shape = 'f32[2,8,128]{2,1,0:T(8,128)}', space=vmem, size = 0x2000, scoped, tag = 'scratch operand']
  #allocation3 [shape = 's32[1]{0}', space=sflag, size = 0x4, scoped, tag = 'scratch operand']
  #allocation10 [shape = 's32[]', space=sflag, size = 0x4, offset = 0, fixed_abs, tag = 'sflag constant byte address 0x0 - dummy sync flag']
  #allocation11 [shape = 's32[]', space=sflag, size = 0x4, offset = 0, fixed_abs, tag = 'sflag constant byte address 0x0 - dummy sync flag']
  #allocation12 [shape = 'u32[]', space=smem, size = 0x4, offset = 0x44, fixed_abs, tag = 'smem constant byte address 0x44 - assertion arg 0']
  #allocation13 [shape = 'u32[]', space=smem, size = 0x4, offset = 0x48, fixed_abs, tag = 'smem constant byte address 0x48 - assertion arg 1']
  %s0 = inlined_call_operand.hbm [shape: f32[8,128], index: 0, kind: input, shape index: {}]
  %s1 = inlined_call_operand.hbm [shape: f32[2,128,128], index: 1, kind: input, shape index: {}]
  %s2 = inlined_call_operand.vmem [shape: f32[2,2,128], index: 2, kind: input, shape index: {}]
  %s3 = inlined_call_operand.hbm [shape: f32[128,128], index: 3, kind: input, shape index: {}]
  %s4 = inlined_call_operand.vmem [shape: f32[1,128], index: 4, kind: input, shape index: {}]
  %s5 = inlined_call_operand.hbm [shape: f32[8,128], index: 5, kind: output, shape index: {}]
  %s6 = sld [smem:[#allocation0]]
  $region89: #{tpu_custom_call.1} parent=0
    _
  %s8 = ssub.s32 1, %s6
  %s9 = scalar_select 0, %s8, %s6
  $region1: #{tpu_custom_call.1} parent=0
    #allocation4 [shape = 'u8[131072]{0}', space=vmem, size = 0x20000, scoped, tag = 'input window, operand 1']
    #allocation5 [shape = 's32[2]{0}', space=sflag, size = 0x8, scoped, tag = 'scoped memory for tpu_custom_call.1']
    #allocation6 [shape = 's32[2]{0}', space=sflag, size = 0x8, scoped, tag = 'scoped memory for tpu_custom_call.1']
    #allocation7 [shape = 'u8[131072]{0}', space=vmem, size = 0x20000, scoped, tag = 'input window, operand 3']
    #allocation8 [shape = 's32[2]{0}', space=sflag, size = 0x8, scoped, tag = 'scoped memory for tpu_custom_call.1']
    #allocation9 [shape = 'u8[4096]{0}', space=vmem, size = 0x1000, scoped, tag = 'output window, operand 0, single buffered']
    %10 = vsyncpa [#allocation5], 0
    %s11 = scalar_lea.sflag [#allocation5], 1
    %12 = vsyncpa %s11, 0
    %13 = vsyncpa [#allocation8], 0
    %s14 = scalar_lea.sflag [#allocation8], 1
    %15 = vsyncpa %s14, 0
    %16 = vsyncpa [#allocation6], 0
    loop: start=0, step=1, limit=4
    $region2: #{tpu_custom_call.1} parent=1 // loop_pre_header
      _
    $region3: #{tpu_custom_call.1} parent=1 // loop_header
      %s18 = sphi 0, %s22
      %p19 = scmp.ge.s32.totalorder %s18, 4
      %s25 = sphi 0, %s37
      %s26 = sphi 0, %s33
      %s27 = sphi 0, %s25
      %s28 = sphi 0, %s26
      %s29 = sphi 0, %s27
      %s30 = sphi 0, %s28
      %s42 = sphi 0, %s44
      %s45 = sphi 0, %s42
      %s46 = sphi 0, %s45
      %s62 = sphi 0, %s46
      %s70 = sphi 0, %s72
      %s73 = sphi 0, %s70
      %s74 = sphi 0, %s73
      %s90 = sphi 0, %s74
      %s100 = sphi 0, %s102
      %s103 = sphi 0, %s100
      %s104 = sphi 0, %s103
      %s120 = sphi 0, %s104
      %s124 = sphi 0, %s124
      %s126 = sphi 0, %s124
      %s127 = sphi 0, %s126
      %s141 = sphi 0, %s127
      %s145 = sphi 0, %s145
      %s147 = sphi 0, %s145
      %s148 = sphi 0, %s147
      %s162 = sphi 0, %s148
    $region4: #{tpu_custom_call.1} parent=1 // loop_header_branch
      %21 = sbr.rel (%p19) target = $region8
    $region5: #{tpu_custom_call.1} parent=1 // loop_body
      %s23 = ssub.s32 %s18, 1
      %s24 = ssub.s32 %s18, 2
      %s31 = sadd.s32 1, %s26
      %p32 = scmp.ge.s32.totalorder %s31, 1
      %s33 = scalar_select %p32, 0, %s31
      %s34 = sadd.s32 1, %s25
      %s35 = scalar_select %p32, %s34, %s25
      %p36 = scmp.ge.s32.totalorder %s35, 2
      %s37 = scalar_select %p36, 0, %s35
      %s38 = ssub.s32 %s25, %s37
      %s39 = ssub.s32 %s26, %s33
      %s40 = sor.u32 %s38, %s39
      %p41 = scmp.eq.s32.totalorder %s40, 0
      %s43 = sadd.s32 %s42, 1
      %s44 = scalar_select %p41, %s42, %s43
      %p47 = pneg %p41
      %p48 = scmp.eq.s32.totalorder %s18, 1
      %p49 = por %p47, %p48
      %p50 = scmp.ne.s32.totalorder %s42, %s45
      %p51 = scmp.eq.s32.totalorder %s18, 0
      %p52 = por %p50, %p51
      %p53 = scmp.ne.s32.totalorder %s42, %s45
      %p54 = scmp.eq.s32.totalorder %s23, 1
      %p55 = por %p53, %p54
      %p56 = scmp.ne.s32.totalorder %s45, %s46
      %p57 = scmp.eq.s32.totalorder %s23, 0
      %p58 = por %p56, %p57
      %p59 = scmp.ne.s32.totalorder %s45, %s46
      %p60 = scmp.eq.s32.totalorder %s24, 1
      %p61 = por %p59, %p60
      %p63 = scmp.ne.s32.totalorder %s46, %s62
      %p64 = scmp.eq.s32.totalorder %s24, 0
      %p65 = por %p63, %p64
      %s66 = ssub.s32 %s25, %s37
      %s67 = ssub.s32 %s26, %s33
      %s68 = sor.u32 %s66, %s67
      %p69 = scmp.eq.s32.totalorder %s68, 0
      %s71 = sadd.s32 %s70, 1
      %s72 = scalar_select %p69, %s70, %s71
      %p75 = pneg %p69
      %p76 = scmp.eq.s32.totalorder %s18, 1
      %p77 = por %p75, %p76
      %p78 = scmp.ne.s32.totalorder %s70, %s73
      %p79 = scmp.eq.s32.totalorder %s18, 0
      %p80 = por %p78, %p79
      %p81 = scmp.ne.s32.totalorder %s70, %s73
      %p82 = scmp.eq.s32.totalorder %s23, 1
      %p83 = por %p81, %p82
      %p84 = scmp.ne.s32.totalorder %s73, %s74
      %p85 = scmp.eq.s32.totalorder %s23, 0
      %p86 = por %p84, %p85
      %p87 = scmp.ne.s32.totalorder %s73, %s74
      %p88 = scmp.eq.s32.totalorder %s24, 1
      %p89 = por %p87, %p88
      %p91 = scmp.ne.s32.totalorder %s74, %s90
      %p92 = scmp.eq.s32.totalorder %s24, 0
      %p93 = por %p91, %p92
      %p94 = scmp.eq.s32.totalorder %s25, 1
      %s95 = scalar_select %p94, %s26, 0
      %p96 = scmp.eq.s32.totalorder %s37, 1
      %s97 = scalar_select %p96, %s33, 0
      %s98 = ssub.s32 %s95, %s97
      %p99 = scmp.eq.s32.totalorder %s98, 0
      %s101 = sadd.s32 %s100, 1
      %s102 = scalar_select %p99, %s100, %s101
      %p105 = pneg %p99
      %p106 = scmp.eq.s32.totalorder %s18, 1
      %p107 = por %p105, %p106
      %p108 = scmp.ne.s32.totalorder %s100, %s103
      %p109 = scmp.eq.s32.totalorder %s18, 0
      %p110 = por %p108, %p109
      %p111 = scmp.ne.s32.totalorder %s100, %s103
      %p112 = scmp.eq.s32.totalorder %s23, 1
      %p113 = por %p111, %p112
      %p114 = scmp.ne.s32.totalorder %s103, %s104
      %p115 = scmp.eq.s32.totalorder %s23, 0
      %p116 = por %p114, %p115
      %p117 = scmp.ne.s32.totalorder %s103, %s104
      %p118 = scmp.eq.s32.totalorder %s24, 1
      %p119 = por %p117, %p118
      %p121 = scmp.ne.s32.totalorder %s104, %s120
      %p122 = scmp.eq.s32.totalorder %s24, 0
      %p123 = por %p121, %p122
      %s125 = sadd.s32 %s124, 1
      %p128 = scmp.eq.s32.totalorder %s18, 1
      %p129 = scmp.ne.s32.totalorder %s124, %s126
      %p130 = scmp.eq.s32.totalorder %s18, 0
      %p131 = por %p129, %p130
      %p132 = scmp.ne.s32.totalorder %s124, %s126
      %p133 = scmp.eq.s32.totalorder %s23, 1
      %p134 = por %p132, %p133
      %p135 = scmp.ne.s32.totalorder %s126, %s127
      %p136 = scmp.eq.s32.totalorder %s23, 0
      %p137 = por %p135, %p136
      %p138 = scmp.ne.s32.totalorder %s126, %s127
      %p139 = scmp.eq.s32.totalorder %s24, 1
      %p140 = por %p138, %p139
      %p142 = scmp.ne.s32.totalorder %s127, %s141
      %p143 = scmp.eq.s32.totalorder %s24, 0
      %p144 = por %p142, %p143
      %s146 = sadd.s32 %s145, 1
      %p149 = scmp.eq.s32.totalorder %s18, 1
      %p150 = scmp.ne.s32.totalorder %s145, %s147
      %p151 = scmp.eq.s32.totalorder %s18, 0
      %p152 = por %p150, %p151
      %p153 = scmp.ne.s32.totalorder %s145, %s147
      %p154 = scmp.eq.s32.totalorder %s23, 1
      %p155 = por %p153, %p154
      %p156 = scmp.ne.s32.totalorder %s147, %s148
      %p157 = scmp.eq.s32.totalorder %s23, 0
      %p158 = por %p156, %p157
      %p159 = scmp.ne.s32.totalorder %s147, %s148
      %p160 = scmp.eq.s32.totalorder %s24, 1
      %p161 = por %p159, %p160
      %p163 = scmp.ne.s32.totalorder %s148, %s162
      %p164 = scmp.eq.s32.totalorder %s24, 0
      %p165 = por %p163, %p164
      %p166 = scmp.le.s32.totalorder 1, %s18
      %p167 = scmp.lt.s32.totalorder %s18, 3
      %p168 = pnand %p166, %p167
      %p169 = pneg %p168
      // Predicated region
      $region9: #{tpu_custom_call.1} parent=5 // pred_check
        _
      $region10: #{tpu_custom_call.1} parent=5 // pred_check_branch
        %171 = sbr.rel (%p168) target = $region12
      $region11: #{tpu_custom_call.1} parent=5 // pred_region
        %s172 = ssub.s32 %s18, 1
        // Predicated region
        $region13: #{tpu_custom_call.1} parent=11 // pred_check
          %p173 = pneg %p137
        $region14: #{tpu_custom_call.1} parent=11 // pred_check_branch
          %175 = sbr.rel (%p173) target = $region16
        $region15: #{tpu_custom_call.1} parent=11 // pred_region
          _
        $region16: #{tpu_custom_call.1} parent=11 // pred_fallthru
          _
      $region12: #{tpu_custom_call.1} parent=5 // pred_fallthru
        _
      %p176 = scmp.lt.s32.totalorder %s18, 2
      // Predicated region
      $region17: #{tpu_custom_call.1} parent=5 // pred_check
        %p177 = pneg %p176
      $region18: #{tpu_custom_call.1} parent=5 // pred_check_branch
        %179 = sbr.rel (%p177) target = $region20
      $region19: #{tpu_custom_call.1} parent=5 // pred_region
        // Predicated region
        $region21: #{tpu_custom_call.1} parent=19 // pred_check
          %p180 = pneg %p52
        $region22: #{tpu_custom_call.1} parent=19 // pred_check_branch
          %182 = sbr.rel (%p180) target = $region24
        $region23: #{tpu_custom_call.1} parent=19 // pred_region
          %s183 = sand.u32 %s42, 1
          %s184 = scalar_lea.sflag [#allocation5], %s183
          %s185 = sand.u32 %s42, 1
          %s186 = smul.addr %s185, 128
          %s187 = scalar_lea.vmem [#allocation4], %s186
          %s189 = ssub.s32 2048, 2048
          %190 = vsyncadd %s184, %s189
          %s191 = smul.addr %s25, 16
          %s192 = sadd.s32 %s26, %s191
          %s193 = smul.addr %s192, 128
          %s194 = scalar_lea.hbm %s1, %s193
          %s195 = sshll.u32 %s187, 4
          %s196 = int_to_ptr.vmem [resolvable:$true] %s195
          %201 = dma.hbm_to_vmem [thread:$0]  %s194, 2048, %s196, %s184, 128, 128, 8
        $region24: #{tpu_custom_call.1} parent=19 // pred_fallthru
          _
        // Predicated region
        $region25: #{tpu_custom_call.1} parent=19 // pred_check
          %p202 = pneg %p80
        $region26: #{tpu_custom_call.1} parent=19 // pred_check_branch
          %204 = sbr.rel (%p202) target = $region28
        $region27: #{tpu_custom_call.1} parent=19 // pred_region
          %p205 = scmp.lt.s32.totalorder %s25, 1
          %s206 = scalar_select %p205, %s25, 1
          %p207 = scmp.lt.s32.totalorder %s26, 0
          %s208 = scalar_select %p207, %s26, 0
          %s209 = sadd.s32 %s208, %s206
          %s210 = smul.addr %s209, 2
          %s211 = scalar_lea.vmem %s2, %s210
        $region28: #{tpu_custom_call.1} parent=19 // pred_fallthru
          _
        // Predicated region
        $region29: #{tpu_custom_call.1} parent=19 // pred_check
          %p212 = pneg %p110
        $region30: #{tpu_custom_call.1} parent=19 // pred_check_branch
          %214 = sbr.rel (%p212) target = $region32
        $region31: #{tpu_custom_call.1} parent=19 // pred_region
          %s215 = sand.u32 %s100, 1
          %s216 = scalar_lea.sflag [#allocation8], %s215
          %s217 = sand.u32 %s100, 1
          %s218 = smul.addr %s217, 128
          %s219 = scalar_lea.vmem [#allocation7], %s218
          %p220 = scmp.eq.s32.totalorder %s25, 1
          %s221 = scalar_select %p220, %s26, 0
          %s222 = smul.u32 16, %s221
          %s224 = ssub.s32 2048, 2048
          %225 = vsyncadd %s216, %s224
          %s226 = smul.addr %s222, 128
          %s227 = scalar_lea.hbm %s3, %s226
          %s228 = sshll.u32 %s219, 4
          %s229 = int_to_ptr.vmem [resolvable:$true] %s228
          %234 = dma.hbm_to_vmem [thread:$0]  %s227, 2048, %s229, %s216, 128, 128, 8
        $region32: #{tpu_custom_call.1} parent=19 // pred_fallthru
          _
      $region20: #{tpu_custom_call.1} parent=5 // pred_fallthru
        _
      %p235 = scmp.le.s32.totalorder 1, %s18
      %p236 = scmp.lt.s32.totalorder %s18, 3
      %p237 = pnand %p235, %p236
      %p238 = pneg %p237
      // Predicated region
      $region33: #{tpu_custom_call.1} parent=5 // pred_check
        _
      $region34: #{tpu_custom_call.1} parent=5 // pred_check_branch
        %240 = sbr.rel (%p237) target = $region36
      $region35: #{tpu_custom_call.1} parent=5 // pred_region
        %s241 = ssub.s32 %s18, 1
        %s242 = sand.u32 %s45, 1
        %s243 = scalar_lea.sflag [#allocation5], %s242
        %s244 = sand.u32 %s45, 1
        %s245 = smul.addr %s244, 128
        %s246 = scalar_lea.vmem [#allocation4], %s245
        // Predicated region
        $region37: #{tpu_custom_call.1} parent=35 // pred_check
          %p247 = pneg %p58
        $region38: #{tpu_custom_call.1} parent=35 // pred_check_branch
          %249 = sbr.rel (%p247) target = $region40
        $region39: #{tpu_custom_call.1} parent=35 // pred_region
          %250 = dma.done %s243, 2048
        $region40: #{tpu_custom_call.1} parent=35 // pred_fallthru
          _
        %s251 = sand.u32 %s103, 1
        %s252 = scalar_lea.sflag [#allocation8], %s251
        %s253 = sand.u32 %s103, 1
        %s254 = smul.addr %s253, 128
        %s255 = scalar_lea.vmem [#allocation7], %s254
        // Predicated region
        $region41: #{tpu_custom_call.1} parent=35 // pred_check
          %p256 = pneg %p116
        $region42: #{tpu_custom_call.1} parent=35 // pred_check_branch
          %258 = sbr.rel (%p256) target = $region44
        $region43: #{tpu_custom_call.1} parent=35 // pred_region
          %259 = dma.done %s252, 2048
        $region44: #{tpu_custom_call.1} parent=35 // pred_fallthru
          _
        %s260 = sand.u32 %s45, 1
        %s261 = scalar_lea.sflag [#allocation5], %s260
        %s262 = sand.u32 %s45, 1
        %s263 = smul.addr %s262, 128
        %s264 = scalar_lea.vmem [#allocation4], %s263
        %p265 = pneg %p58
        %p266 = pneg %p55
        %p267 = scmp.lt.s32.totalorder %s27, 1
        %s268 = scalar_select %p267, %s27, 1
        %p269 = scmp.lt.s32.totalorder %s28, 0
        %s270 = scalar_select %p269, %s28, 0
        %s271 = sadd.s32 %s270, %s268
        %s272 = smul.addr %s271, 2
        %s273 = scalar_lea.vmem %s2, %s272
        %p274 = pneg %p86
        %p275 = pneg %p83
        %s276 = sand.u32 %s103, 1
        %s277 = scalar_lea.sflag [#allocation8], %s276
        %s278 = sand.u32 %s103, 1
        %s279 = smul.addr %s278, 128
        %s280 = scalar_lea.vmem [#allocation7], %s279
        %p281 = pneg %p116
        %p282 = pneg %p113
        %p283 = pneg %p137
        %p284 = pneg %p134
        %p285 = pneg %p158
        %p286 = pneg %p155
        %p287 = scmp.lt.s32.totalorder %s27, 1
        %s288 = scalar_select %p287, %s27, 1
        %p289 = scmp.lt.s32.totalorder %s28, 0
        %s290 = scalar_select %p289, %s28, 0
        %s291 = sadd.s32 %s290, %s288
        %s292 = smul.addr %s291, 2
        %s293 = scalar_lea.vmem %s2, %s292
        %p294 = scmp.eq.s32.totalorder %s27, 1
        %s295 = scalar_select %p294, %s28, 0
        %s296 = smul.u32 16, %s295
        %p297 = scmp.eq.s32.totalorder %s27, 0
        %p298 = scmp.eq.s32.totalorder %s28, 0
        %p299 = pnand %p297, %p298
        %p300 = pneg %p299
        // Predicated region
        $region45: #{tpu_custom_call.1} parent=35 // pred_check
          _
        $region46: #{tpu_custom_call.1} parent=35 // pred_check_branch
          %302 = sbr.rel (%p299) target = $region48
        $region47: #{tpu_custom_call.1} parent=35 // pred_region
          // Predicated region
          $region49: #{tpu_custom_call.1} parent=47 // pred_check
            _
          $region50: #{tpu_custom_call.1} parent=47 // pred_check_branch
            %304 = sbr.rel target = $region52
          $region51: #{tpu_custom_call.1} parent=47 // pred_region
            %305 = sst [smem:[#allocation12]] [#allocation11]
            %306 = sst [smem:[#allocation13]] [#allocation10]
          $region52: #{tpu_custom_call.1} parent=47 // pred_fallthru
            _
          %308 = shalt.err (0)
          %s310 = sshll.u32 [#allocation2], 4
          %s311 = int_to_ptr.vmem [resolvable:$true] %s310
          %313 = dma.hbm_to_vmem [thread:$0]  %s0, 128, %s311, [#allocation3]
          %s314 = smul.u32 8, 1
          %s315 = sshll.u32 %s314, 4
          %316 = dma.done [#allocation3], %s315
        $region48: #{tpu_custom_call.1} parent=35 // pred_fallthru
          _
        %s317 = smul.u32 %s28, 128
        %p318 = scmp.lt.s32.totalorder %s27, 0
        %s319 = ssub.s32 0, %s27
        %s320 = scalar_select %p318, %s319, %s27
        %s321 = sand.u32 %s320, 1
        %s322 = ssub.s32 0, %s321
        %s323 = scalar_select %p318, %s322, %s321
        %p324 = scmp.ne.s32.totalorder %s323, 0
        %p325 = scmp.lt.s32.totalorder %s323, 0
        %p326 = pnand %p325, %p324
        %p327 = pneg %p326
        %s328 = sadd.s32 %s323, 2
        %s329 = scalar_select %p327, %s328, %s323
        %p330 = scmp.eq.s32.totalorder %s329, 0
        // Predicated region
        $region53: #{tpu_custom_call.1} parent=35 // pred_check
          %p331 = pneg %p330
        $region54: #{tpu_custom_call.1} parent=35 // pred_check_branch
          %333 = sbr.rel (%p331) target = $region56
        $region55: #{tpu_custom_call.1} parent=35 // pred_region
          %v334 = vld [vmem:[%s246] sm:$0xff]
          %v335 = vld [vmem:[%s246 + $0x8] sm:$0xff]
          %v336 = vld [vmem:[%s246 + $0x10] sm:$0xff]
          %v337 = vld [vmem:[%s246 + $0x18] sm:$0xff]
          %v338 = vld [vmem:[%s246 + $0x20] sm:$0xff]
          %v339 = vld [vmem:[%s246 + $0x28] sm:$0xff]
          %v340 = vld [vmem:[%s246 + $0x30] sm:$0xff]
          %v341 = vld [vmem:[%s246 + $0x38] sm:$0xff]
          %v342 = vld [vmem:[%s246 + $0x40] sm:$0xff]
          %v343 = vld [vmem:[%s246 + $0x48] sm:$0xff]
          %v344 = vld [vmem:[%s246 + $0x50] sm:$0xff]
          %v345 = vld [vmem:[%s246 + $0x58] sm:$0xff]
          %v346 = vld [vmem:[%s246 + $0x60] sm:$0xff]
          %v347 = vld [vmem:[%s246 + $0x68] sm:$0xff]
          %v348 = vld [vmem:[%s246 + $0x70] sm:$0xff]
          %v349 = vld [vmem:[%s246 + $0x78] sm:$0xff]
          %v350 = vld [vmem:[#allocation2] sm:$0xff]
          %351 = vmatprep.subr.mxu0 0.0
          %352 = vmatpush1.msra.mxu0 %v334
          %353 = vmatprep.subr.mxu0 0.0
          %354 = vmatpush1.msra.mxu0 %v335
          %355 = vmatprep.subr.mxu0 0.0
          %356 = vmatpush1.msra.mxu0 %v336
          %357 = vmatprep.subr.mxu0 0.0
          %358 = vmatpush1.msra.mxu0 %v337
          %359 = vmatprep.subr.mxu0 0.0
          %360 = vmatpush1.msra.mxu0 %v338
          %361 = vmatprep.subr.mxu0 0.0
          %362 = vmatpush1.msra.mxu0 %v339
          %363 = vmatprep.subr.mxu0 0.0
          %364 = vmatpush1.msra.mxu0 %v340
          %365 = vmatprep.subr.mxu0 0.0
          %366 = vmatpush1.msra.mxu0 %v341
          %367 = vmatprep.subr.mxu0 0.0
          %368 = vmatpush1.msra.mxu0 %v342
          %369 = vmatprep.subr.mxu0 0.0
          %370 = vmatpush1.msra.mxu0 %v343
          %371 = vmatprep.subr.mxu0 0.0
          %372 = vmatpush1.msra.mxu0 %v344
          %373 = vmatprep.subr.mxu0 0.0
          %374 = vmatpush1.msra.mxu0 %v345
          %375 = vmatprep.subr.mxu0 0.0
          %376 = vmatpush1.msra.mxu0 %v346
          %377 = vmatprep.subr.mxu0 0.0
          %378 = vmatpush1.msra.mxu0 %v347
          %379 = vmatprep.subr.mxu0 0.0
          %380 = vmatpush1.msra.mxu0 %v348
          %381 = vmatprep.subr.mxu0 0.0
          %382 = vmatpush1.msra.mxu0 %v349
          %383 = vmatprep.subr.mxu0 0.0
          %384 = vmatpush1.msra.mxu0 0.0
          %385 = vmatprep.subr.mxu0 0.0
          %386 = vmatpush1.msra.mxu0 0.0
          %387 = vmatprep.subr.mxu0 0.0
          %388 = vmatpush1.msra.mxu0 0.0
          %389 = vmatprep.subr.mxu0 0.0
          %390 = vmatpush1.msra.mxu0 0.0
          %391 = vmatprep.subr.mxu0 0.0
          %392 = vmatpush1.msra.mxu0 0.0
          %393 = vmatprep.subr.mxu0 0.0
          %394 = vmatpush1.msra.mxu0 0.0
          %395 = vmatprep.subr.mxu0 0.0
          %396 = vmatpush1.msra.mxu0 0.0
          %397 = vmatprep.subr.mxu0 0.0
          %398 = vmatpush1.msra.mxu0 0.0
          %399 = vmatprep.subr.mxu0 0.0
          %400 = vmatpush1.msra.mxu0 0.0
          %401 = vmatprep.subr.mxu0 0.0
          %402 = vmatpush1.msra.mxu0 0.0
          %403 = vmatprep.subr.mxu0 0.0
          %404 = vmatpush1.msra.mxu0 0.0
          %405 = vmatprep.subr.mxu0 0.0
          %406 = vmatpush1.msra.mxu0 0.0
          %407 = vmatprep.subr.mxu0 0.0
          %408 = vmatpush1.msra.mxu0 0.0
          %409 = vmatprep.subr.mxu0 0.0
          %410 = vmatpush1.msra.mxu0 0.0
          %411 = vmatprep.subr.mxu0 0.0
          %412 = vmatpush1.msra.mxu0 0.0
          %413 = vmatprep.subr.mxu0 0.0
          %414 = vmatpush1.msra.mxu0 0.0
          %415 = vmatprep.mubr.f32.mxu0 0.0
          %416 = vmatmul.mubr.f32.gmra.mrb[0].mxu0 %v350
          %v417 = vpop.f32.mrb[0].mxu0
          %v418 = vadd.f32 0.0, %v417
          %v419 = vpop.f32.mrb[0].mxu0
          %420 = vdwg.mxu0
          %v421 = vld [vmem:[%s293] sm:$0x3]
          %v422 = vrot.slane %v418, 4
          %v423 = vadd.f32 %v418, %v422
          %v424 = vrot.slane %v423, 2
          %v425 = vadd.f32 %v423, %v424
          %v426 = vrot.slane %v425, 1
          %v427 = vadd.f32 %v425, %v426
          %v428 = vmul.f32 %v427, 0.125
          %v429 = vsub.f32 %v418, %v428
          %v430 = vmul.f32 %v429, %v429
          %v431 = vrot.slane %v430, 4
          %v432 = vadd.f32 %v430, %v431
          %v433 = vrot.slane %v432, 2
          %v434 = vadd.f32 %v432, %v433
          %v435 = vrot.slane %v434, 1
          %v436 = vadd.f32 %v434, %v435
          %v437 = vmul.f32 %v436, 0.125
          %v438 = vadd.f32 %v437, 1e-05
          %v439 = vrsqrt.pop %v438
          %v440 = vmul.f32 %v421, %v439
          %v441 = vlaneseq
          %v442 = vshrl.u32 %v441, 7
          %v443 = vsub.s32 0, %v442
          %v444 = vrot.slane %v440, %v443
          %v445 = vmul.f32 %v429, %v444
          %v446 = vlaneseq
          %v447 = vshrl.u32 %v446, 7
          %v448 = vsub.s32 1, %v447
          %v449 = vrot.slane %v421, %v448
          %v450 = vadd.f32 %v445, %v449
          %v451 = vxor.u32 %v450, 2147483648
          %v452 = vmul.f32 %v451, 1.442695
          %v453 = vpow.pop %v452
          %v454 = vadd.f32 %v453, 1.0
          %v455 = vrcp.pop %v454
          %v456 = vmul.f32 1.0, %v455
          %v457 = vmul.f32 %v450, %v456
          %s458 = scalar_lea.vmem [#allocation2], 8
          %s459 = sshra.s32 %s317, 7
          %s460 = sand.u32 %s317, 127
          %s461 = scalar_lea.vmem %s458, %s459 [#allocation2]
          %462 = vst [vmem:[%s461] sm:$0xff] %v457
          %p463 = scmp.eq.s32.totalorder %s27, 1
          // Predicated region
          $region57: #{tpu_custom_call.1} parent=55 // pred_check
            %p464 = pneg %p463
          $region58: #{tpu_custom_call.1} parent=55 // pred_check_branch
            %466 = sbr.rel (%p464) target = $region60
          $region59: #{tpu_custom_call.1} parent=55 // pred_region
            // Predicated region
            $region61: #{tpu_custom_call.1} parent=59 // pred_check
              %p467 = pneg %p298
            $region62: #{tpu_custom_call.1} parent=59 // pred_check_branch
              %469 = sbr.rel (%p467) target = $region64
            $region63: #{tpu_custom_call.1} parent=59 // pred_region
              %v470 = vld [vmem:[%s4] sm:$0x1]
              %v472 = vlaneseq
              %v473 = vshrl.u32 %v472, 7
              %v474 = vsub.s32 0, %v473
              %v475 = vrot.slane %v470, %v474
              %477 = vst [vmem:[#allocation9] sm:$0xff] %v475
            $region64: #{tpu_custom_call.1} parent=59 // pred_fallthru
              _
            %v478 = vld [vmem:[%s255] sm:$0xff]
            %v479 = vld [vmem:[%s255 + $0x8] sm:$0xff]
            %v480 = vld [vmem:[%s255 + $0x10] sm:$0xff]
            %v481 = vld [vmem:[%s255 + $0x18] sm:$0xff]
            %v482 = vld [vmem:[%s255 + $0x20] sm:$0xff]
            %v483 = vld [vmem:[%s255 + $0x28] sm:$0xff]
            %v484 = vld [vmem:[%s255 + $0x30] sm:$0xff]
            %v485 = vld [vmem:[%s255 + $0x38] sm:$0xff]
            %v486 = vld [vmem:[%s255 + $0x40] sm:$0xff]
            %v487 = vld [vmem:[%s255 + $0x48] sm:$0xff]
            %v488 = vld [vmem:[%s255 + $0x50] sm:$0xff]
            %v489 = vld [vmem:[%s255 + $0x58] sm:$0xff]
            %v490 = vld [vmem:[%s255 + $0x60] sm:$0xff]
            %v491 = vld [vmem:[%s255 + $0x68] sm:$0xff]
            %v492 = vld [vmem:[%s255 + $0x70] sm:$0xff]
            %v493 = vld [vmem:[%s255 + $0x78] sm:$0xff]
            %v494 = vld [vmem:[#allocation9] sm:$0xff]
            %495 = vmatprep.subr.mxu0 0.0
            %496 = vmatpush1.msra.mxu0 %v478
            %497 = vmatprep.subr.mxu0 0.0
            %498 = vmatpush1.msra.mxu0 %v479
            %499 = vmatprep.subr.mxu0 0.0
            %500 = vmatpush1.msra.mxu0 %v480
            %501 = vmatprep.subr.mxu0 0.0
            %502 = vmatpush1.msra.mxu0 %v481
            %503 = vmatprep.subr.mxu0 0.0
            %504 = vmatpush1.msra.mxu0 %v482
            %505 = vmatprep.subr.mxu0 0.0
            %506 = vmatpush1.msra.mxu0 %v483
            %507 = vmatprep.subr.mxu0 0.0
            %508 = vmatpush1.msra.mxu0 %v484
            %509 = vmatprep.subr.mxu0 0.0
            %510 = vmatpush1.msra.mxu0 %v485
            %511 = vmatprep.subr.mxu0 0.0
            %512 = vmatpush1.msra.mxu0 %v486
            %513 = vmatprep.subr.mxu0 0.0
            %514 = vmatpush1.msra.mxu0 %v487
            %515 = vmatprep.subr.mxu0 0.0
            %516 = vmatpush1.msra.mxu0 %v488
            %517 = vmatprep.subr.mxu0 0.0
            %518 = vmatpush1.msra.mxu0 %v489
            %519 = vmatprep.subr.mxu0 0.0
            %520 = vmatpush1.msra.mxu0 %v490
            %521 = vmatprep.subr.mxu0 0.0
            %522 = vmatpush1.msra.mxu0 %v491
            %523 = vmatprep.subr.mxu0 0.0
            %524 = vmatpush1.msra.mxu0 %v492
            %525 = vmatprep.subr.mxu0 0.0
            %526 = vmatpush1.msra.mxu0 %v493
            %527 = vmatprep.subr.mxu0 0.0
            %528 = vmatpush1.msra.mxu0 0.0
            %529 = vmatprep.subr.mxu0 0.0
            %530 = vmatpush1.msra.mxu0 0.0
            %531 = vmatprep.subr.mxu0 0.0
            %532 = vmatpush1.msra.mxu0 0.0
            %533 = vmatprep.subr.mxu0 0.0
            %534 = vmatpush1.msra.mxu0 0.0
            %535 = vmatprep.subr.mxu0 0.0
            %536 = vmatpush1.msra.mxu0 0.0
            %537 = vmatprep.subr.mxu0 0.0
            %538 = vmatpush1.msra.mxu0 0.0
            %539 = vmatprep.subr.mxu0 0.0
            %540 = vmatpush1.msra.mxu0 0.0
            %541 = vmatprep.subr.mxu0 0.0
            %542 = vmatpush1.msra.mxu0 0.0
            %543 = vmatprep.subr.mxu0 0.0
            %544 = vmatpush1.msra.mxu0 0.0
            %545 = vmatprep.subr.mxu0 0.0
            %546 = vmatpush1.msra.mxu0 0.0
            %547 = vmatprep.subr.mxu0 0.0
            %548 = vmatpush1.msra.mxu0 0.0
            %549 = vmatprep.subr.mxu0 0.0
            %550 = vmatpush1.msra.mxu0 0.0
            %551 = vmatprep.subr.mxu0 0.0
            %552 = vmatpush1.msra.mxu0 0.0
            %553 = vmatprep.subr.mxu0 0.0
            %554 = vmatpush1.msra.mxu0 0.0
            %555 = vmatprep.subr.mxu0 0.0
            %556 = vmatpush1.msra.mxu0 0.0
            %557 = vmatprep.subr.mxu0 0.0
            %558 = vmatpush1.msra.mxu0 0.0
            %559 = vmatprep.mubr.f32.mxu0 0.0
            %560 = vmatmul.mubr.f32.gmra.mrb[0].mxu0 %v457
            %v561 = vpop.f32.mrb[0].mxu0
            %v562 = vadd.f32 0.0, %v561
            %v563 = vpop.f32.mrb[0].mxu0
            %564 = vdwg.mxu0
            %v565 = vadd.f32 %v494, %v562
            %566 = vst [vmem:[#allocation9] sm:$0xff] %v565
          $region60: #{tpu_custom_call.1} parent=55 // pred_fallthru
            _
        $region56: #{tpu_custom_call.1} parent=35 // pred_fallthru
          _
        %p567 = scmp.eq.s32.totalorder %s329, 1
        // Predicated region
        $region65: #{tpu_custom_call.1} parent=35 // pred_check
          %p568 = pneg %p567
        $region66: #{tpu_custom_call.1} parent=35 // pred_check_branch
          %570 = sbr.rel (%p568) target = $region68
        $region67: #{tpu_custom_call.1} parent=35 // pred_region
          %v571 = vld [vmem:[%s246] sm:$0xff]
          %v572 = vld [vmem:[%s246 + $0x8] sm:$0xff]
          %v573 = vld [vmem:[%s246 + $0x10] sm:$0xff]
          %v574 = vld [vmem:[%s246 + $0x18] sm:$0xff]
          %v575 = vld [vmem:[%s246 + $0x20] sm:$0xff]
          %v576 = vld [vmem:[%s246 + $0x28] sm:$0xff]
          %v577 = vld [vmem:[%s246 + $0x30] sm:$0xff]
          %v578 = vld [vmem:[%s246 + $0x38] sm:$0xff]
          %v579 = vld [vmem:[%s246 + $0x40] sm:$0xff]
          %v580 = vld [vmem:[%s246 + $0x48] sm:$0xff]
          %v581 = vld [vmem:[%s246 + $0x50] sm:$0xff]
          %v582 = vld [vmem:[%s246 + $0x58] sm:$0xff]
          %v583 = vld [vmem:[%s246 + $0x60] sm:$0xff]
          %v584 = vld [vmem:[%s246 + $0x68] sm:$0xff]
          %v585 = vld [vmem:[%s246 + $0x70] sm:$0xff]
          %v586 = vld [vmem:[%s246 + $0x78] sm:$0xff]
          %s587 = scalar_lea.vmem [#allocation2], 8
          %v588 = vld [vmem:[%s587] sm:$0xff]
          %589 = vmatprep.subr.mxu0 0.0
          %590 = vmatpush1.msra.mxu0 %v571
          %591 = vmatprep.subr.mxu0 0.0
          %592 = vmatpush1.msra.mxu0 %v572
          %593 = vmatprep.subr.mxu0 0.0
          %594 = vmatpush1.msra.mxu0 %v573
          %595 = vmatprep.subr.mxu0 0.0
          %596 = vmatpush1.msra.mxu0 %v574
          %597 = vmatprep.subr.mxu0 0.0
          %598 = vmatpush1.msra.mxu0 %v575
          %599 = vmatprep.subr.mxu0 0.0
          %600 = vmatpush1.msra.mxu0 %v576
          %601 = vmatprep.subr.mxu0 0.0
          %602 = vmatpush1.msra.mxu0 %v577
          %603 = vmatprep.subr.mxu0 0.0
          %604 = vmatpush1.msra.mxu0 %v578
          %605 = vmatprep.subr.mxu0 0.0
          %606 = vmatpush1.msra.mxu0 %v579
          %607 = vmatprep.subr.mxu0 0.0
          %608 = vmatpush1.msra.mxu0 %v580
          %609 = vmatprep.subr.mxu0 0.0
          %610 = vmatpush1.msra.mxu0 %v581
          %611 = vmatprep.subr.mxu0 0.0
          %612 = vmatpush1.msra.mxu0 %v582
          %613 = vmatprep.subr.mxu0 0.0
          %614 = vmatpush1.msra.mxu0 %v583
          %615 = vmatprep.subr.mxu0 0.0
          %616 = vmatpush1.msra.mxu0 %v584
          %617 = vmatprep.subr.mxu0 0.0
          %618 = vmatpush1.msra.mxu0 %v585
          %619 = vmatprep.subr.mxu0 0.0
          %620 = vmatpush1.msra.mxu0 %v586
          %621 = vmatprep.subr.mxu0 0.0
          %622 = vmatpush1.msra.mxu0 0.0
          %623 = vmatprep.subr.mxu0 0.0
          %624 = vmatpush1.msra.mxu0 0.0
          %625 = vmatprep.subr.mxu0 0.0
          %626 = vmatpush1.msra.mxu0 0.0
          %627 = vmatprep.subr.mxu0 0.0
          %628 = vmatpush1.msra.mxu0 0.0
          %629 = vmatprep.subr.mxu0 0.0
          %630 = vmatpush1.msra.mxu0 0.0
          %631 = vmatprep.subr.mxu0 0.0
          %632 = vmatpush1.msra.mxu0 0.0
          %633 = vmatprep.subr.mxu0 0.0
          %634 = vmatpush1.msra.mxu0 0.0
          %635 = vmatprep.subr.mxu0 0.0
          %636 = vmatpush1.msra.mxu0 0.0
          %637 = vmatprep.subr.mxu0 0.0
          %638 = vmatpush1.msra.mxu0 0.0
          %639 = vmatprep.subr.mxu0 0.0
          %640 = vmatpush1.msra.mxu0 0.0
          %641 = vmatprep.subr.mxu0 0.0
          %642 = vmatpush1.msra.mxu0 0.0
          %643 = vmatprep.subr.mxu0 0.0
          %644 = vmatpush1.msra.mxu0 0.0
          %645 = vmatprep.subr.mxu0 0.0
          %646 = vmatpush1.msra.mxu0 0.0
          %647 = vmatprep.subr.mxu0 0.0
          %648 = vmatpush1.msra.mxu0 0.0
          %649 = vmatprep.subr.mxu0 0.0
          %650 = vmatpush1.msra.mxu0 0.0
          %651 = vmatprep.subr.mxu0 0.0
          %652 = vmatpush1.msra.mxu0 0.0
          %653 = vmatprep.mubr.f32.mxu0 0.0
          %654 = vmatmul.mubr.f32.gmra.mrb[0].mxu0 %v588
          %v655 = vpop.f32.mrb[0].mxu0
          %v656 = vadd.f32 0.0, %v655
          %v657 = vpop.f32.mrb[0].mxu0
          %658 = vdwg.mxu0
          %v659 = vld [vmem:[%s293] sm:$0x3]
          %v660 = vrot.slane %v656, 4
          %v661 = vadd.f32 %v656, %v660
          %v662 = vrot.slane %v661, 2
          %v663 = vadd.f32 %v661, %v662
          %v664 = vrot.slane %v663, 1
          %v665 = vadd.f32 %v663, %v664
          %v666 = vmul.f32 %v665, 0.125
          %v667 = vsub.f32 %v656, %v666
          %v668 = vmul.f32 %v667, %v667
          %v669 = vrot.slane %v668, 4
          %v670 = vadd.f32 %v668, %v669
          %v671 = vrot.slane %v670, 2
          %v672 = vadd.f32 %v670, %v671
          %v673 = vrot.slane %v672, 1
          %v674 = vadd.f32 %v672, %v673
          %v675 = vmul.f32 %v674, 0.125
          %v676 = vadd.f32 %v675, 1e-05
          %v677 = vrsqrt.pop %v676
          %v678 = vmul.f32 %v659, %v677
          %v679 = vlaneseq
          %v680 = vshrl.u32 %v679, 7
          %v681 = vsub.s32 0, %v680
          %v682 = vrot.slane %v678, %v681
          %v683 = vmul.f32 %v667, %v682
          %v684 = vlaneseq
          %v685 = vshrl.u32 %v684, 7
          %v686 = vsub.s32 1, %v685
          %v687 = vrot.slane %v659, %v686
          %v688 = vadd.f32 %v683, %v687
          %v689 = vxor.u32 %v688, 2147483648
          %v690 = vmul.f32 %v689, 1.442695
          %v691 = vpow.pop %v690
          %v692 = vadd.f32 %v691, 1.0
          %v693 = vrcp.pop %v692
          %v694 = vmul.f32 1.0, %v693
          %v695 = vmul.f32 %v688, %v694
          %s696 = sshra.s32 %s317, 7
          %s697 = sand.u32 %s317, 127
          %s698 = scalar_lea.vmem [#allocation2], %s696
          %699 = vst [vmem:[%s698] sm:$0xff] %v695
          %p700 = scmp.eq.s32.totalorder %s27, 1
          // Predicated region
          $region69: #{tpu_custom_call.1} parent=67 // pred_check
            %p701 = pneg %p700
          $region70: #{tpu_custom_call.1} parent=67 // pred_check_branch
            %703 = sbr.rel (%p701) target = $region72
          $region71: #{tpu_custom_call.1} parent=67 // pred_region
            // Predicated region
            $region73: #{tpu_custom_call.1} parent=71 // pred_check
              %p704 = pneg %p298
            $region74: #{tpu_custom_call.1} parent=71 // pred_check_branch
              %706 = sbr.rel (%p704) target = $region76
            $region75: #{tpu_custom_call.1} parent=71 // pred_region
              %v707 = vld [vmem:[%s4] sm:$0x1]
              %v709 = vlaneseq
              %v710 = vshrl.u32 %v709, 7
              %v711 = vsub.s32 0, %v710
              %v712 = vrot.slane %v707, %v711
              %714 = vst [vmem:[#allocation9] sm:$0xff] %v712
            $region76: #{tpu_custom_call.1} parent=71 // pred_fallthru
              _
            %v715 = vld [vmem:[%s255] sm:$0xff]
            %v716 = vld [vmem:[%s255 + $0x8] sm:$0xff]
            %v717 = vld [vmem:[%s255 + $0x10] sm:$0xff]
            %v718 = vld [vmem:[%s255 + $0x18] sm:$0xff]
            %v719 = vld [vmem:[%s255 + $0x20] sm:$0xff]
            %v720 = vld [vmem:[%s255 + $0x28] sm:$0xff]
            %v721 = vld [vmem:[%s255 + $0x30] sm:$0xff]
            %v722 = vld [vmem:[%s255 + $0x38] sm:$0xff]
            %v723 = vld [vmem:[%s255 + $0x40] sm:$0xff]
            %v724 = vld [vmem:[%s255 + $0x48] sm:$0xff]
            %v725 = vld [vmem:[%s255 + $0x50] sm:$0xff]
            %v726 = vld [vmem:[%s255 + $0x58] sm:$0xff]
            %v727 = vld [vmem:[%s255 + $0x60] sm:$0xff]
            %v728 = vld [vmem:[%s255 + $0x68] sm:$0xff]
            %v729 = vld [vmem:[%s255 + $0x70] sm:$0xff]
            %v730 = vld [vmem:[%s255 + $0x78] sm:$0xff]
            %v731 = vld [vmem:[#allocation9] sm:$0xff]
            %732 = vmatprep.subr.mxu0 0.0
            %733 = vmatpush1.msra.mxu0 %v715
            %734 = vmatprep.subr.mxu0 0.0
            %735 = vmatpush1.msra.mxu0 %v716
            %736 = vmatprep.subr.mxu0 0.0
            %737 = vmatpush1.msra.mxu0 %v717
            %738 = vmatprep.subr.mxu0 0.0
            %739 = vmatpush1.msra.mxu0 %v718
            %740 = vmatprep.subr.mxu0 0.0
            %741 = vmatpush1.msra.mxu0 %v719
            %742 = vmatprep.subr.mxu0 0.0
            %743 = vmatpush1.msra.mxu0 %v720
            %744 = vmatprep.subr.mxu0 0.0
            %745 = vmatpush1.msra.mxu0 %v721
            %746 = vmatprep.subr.mxu0 0.0
            %747 = vmatpush1.msra.mxu0 %v722
            %748 = vmatprep.subr.mxu0 0.0
            %749 = vmatpush1.msra.mxu0 %v723
            %750 = vmatprep.subr.mxu0 0.0
            %751 = vmatpush1.msra.mxu0 %v724
            %752 = vmatprep.subr.mxu0 0.0
            %753 = vmatpush1.msra.mxu0 %v725
            %754 = vmatprep.subr.mxu0 0.0
            %755 = vmatpush1.msra.mxu0 %v726
            %756 = vmatprep.subr.mxu0 0.0
            %757 = vmatpush1.msra.mxu0 %v727
            %758 = vmatprep.subr.mxu0 0.0
            %759 = vmatpush1.msra.mxu0 %v728
            %760 = vmatprep.subr.mxu0 0.0
            %761 = vmatpush1.msra.mxu0 %v729
            %762 = vmatprep.subr.mxu0 0.0
            %763 = vmatpush1.msra.mxu0 %v730
            %764 = vmatprep.subr.mxu0 0.0
            %765 = vmatpush1.msra.mxu0 0.0
            %766 = vmatprep.subr.mxu0 0.0
            %767 = vmatpush1.msra.mxu0 0.0
            %768 = vmatprep.subr.mxu0 0.0
            %769 = vmatpush1.msra.mxu0 0.0
            %770 = vmatprep.subr.mxu0 0.0
            %771 = vmatpush1.msra.mxu0 0.0
            %772 = vmatprep.subr.mxu0 0.0
            %773 = vmatpush1.msra.mxu0 0.0
            %774 = vmatprep.subr.mxu0 0.0
            %775 = vmatpush1.msra.mxu0 0.0
            %776 = vmatprep.subr.mxu0 0.0
            %777 = vmatpush1.msra.mxu0 0.0
            %778 = vmatprep.subr.mxu0 0.0
            %779 = vmatpush1.msra.mxu0 0.0
            %780 = vmatprep.subr.mxu0 0.0
            %781 = vmatpush1.msra.mxu0 0.0
            %782 = vmatprep.subr.mxu0 0.0
            %783 = vmatpush1.msra.mxu0 0.0
            %784 = vmatprep.subr.mxu0 0.0
            %785 = vmatpush1.msra.mxu0 0.0
            %786 = vmatprep.subr.mxu0 0.0
            %787 = vmatpush1.msra.mxu0 0.0
            %788 = vmatprep.subr.mxu0 0.0
            %789 = vmatpush1.msra.mxu0 0.0
            %790 = vmatprep.subr.mxu0 0.0
            %791 = vmatpush1.msra.mxu0 0.0
            %792 = vmatprep.subr.mxu0 0.0
            %793 = vmatpush1.msra.mxu0 0.0
            %794 = vmatprep.subr.mxu0 0.0
            %795 = vmatpush1.msra.mxu0 0.0
            %796 = vmatprep.mubr.f32.mxu0 0.0
            %797 = vmatmul.mubr.f32.gmra.mrb[0].mxu0 %v695
            %v798 = vpop.f32.mrb[0].mxu0
            %v799 = vadd.f32 0.0, %v798
            %v800 = vpop.f32.mrb[0].mxu0
            %801 = vdwg.mxu0
            %v802 = vadd.f32 %v731, %v799
            %803 = vst [vmem:[#allocation9] sm:$0xff] %v802
          $region72: #{tpu_custom_call.1} parent=67 // pred_fallthru
            _
        $region68: #{tpu_custom_call.1} parent=35 // pred_fallthru
          _
        // Predicated region
        $region77: #{tpu_custom_call.1} parent=35 // pred_check
          %p804 = pneg %p155
        $region78: #{tpu_custom_call.1} parent=35 // pred_check_branch
          %806 = sbr.rel (%p804) target = $region80
        $region79: #{tpu_custom_call.1} parent=35 // pred_region
          %s808 = ssub.s32 128, 128
          %809 = vsyncadd [#allocation6], %s808
          %s811 = sshll.u32 [#allocation9], 4
          %s812 = int_to_ptr.vmem [resolvable:$true] %s811
          %814 = dma.vmem_to_hbm [thread:$0]  %s812, 128, %s5, [#allocation6]
        $region80: #{tpu_custom_call.1} parent=35 // pred_fallthru
          _
        // Predicated region
        $region81: #{tpu_custom_call.1} parent=35 // pred_check
          %p815 = pneg %p155
        $region82: #{tpu_custom_call.1} parent=35 // pred_check_branch
          %817 = sbr.rel (%p815) target = $region84
        $region83: #{tpu_custom_call.1} parent=35 // pred_region
          %818 = dma.done [#allocation6], 128
        $region84: #{tpu_custom_call.1} parent=35 // pred_fallthru
          _
      $region36: #{tpu_custom_call.1} parent=5 // pred_fallthru
        _
      %p819 = scmp.le.s32.totalorder 2, %s18
      // Predicated region
      $region85: #{tpu_custom_call.1} parent=5 // pred_check
        %p820 = pneg %p819
      $region86: #{tpu_custom_call.1} parent=5 // pred_check_branch
        %822 = sbr.rel (%p820) target = $region88
      $region87: #{tpu_custom_call.1} parent=5 // pred_region
        %s823 = ssub.s32 %s18, 2
      $region88: #{tpu_custom_call.1} parent=5 // pred_fallthru
        _
    $region6: #{tpu_custom_call.1} parent=1 // loop_footer
      %s22 = sadd.s32 1, %s18
    $region7: #{tpu_custom_call.1} parent=1 // loop_footer_branch
      %17 = sbr.rel target = $region3
    $region8: #{tpu_custom_call.1} parent=1 // loop_exit
      _
    %824 = vsyncpa [#allocation5], 1
    %s825 = scalar_lea.sflag [#allocation5], 1
    %826 = vsyncpa %s825, 1
    %827 = vsyncpa [#allocation8], 1
    %s828 = scalar_lea.sflag [#allocation8], 1
    %829 = vsyncpa %s828, 1
    %830 = vsyncpa [#allocation6], 1
    %s831 = scalar_lea.sflag [#allocation6], 1
    %832 = vsyncpa %s831, 1
  %833 = vsyncmov [#allocation3]
  %s834 = vpop.sfrf %833
  %p835 = scmp.eq.s32.totalorder %s834, 0
  %p836 = pneg %p835
  %838 = shalt.err (%p836)

</llo_original>
